<compile_context>
chip_gen: v7x
topology: tpu7x:2x2x1
jax: 0.10.0
libtpu: 0.0.40
codegen_flags: <defaults>
</compile_context>

<pallas_src>
import functools
import math

import jax
import jax.numpy as jnp
from jax import lax
from jax.experimental import pallas as pl
from jax.experimental.pallas import tpu as pltpu


def _round_up(n, m):
    return ((n + m - 1) // m) * m


def _round_down(n, m):
    return (n // m) * m


# ---------------------------------------------------------------------------
# Kernel 1: sequence reduction (the HBM-bandwidth-bound part).
# softmax over the size-1 context-score axis is identically 1, so the
# attention-weighted context equals the plain sum over the sequence axis.
# ---------------------------------------------------------------------------
def _seq_sum_kernel(mem_ref, ctx_ref, acc_ref):
    s = pl.program_id(1)

    @pl.when(s == 0)
    def _():
        acc_ref[...] = jnp.zeros_like(acc_ref)

    # (seq_chunk, TB*E) -> (1, TB*E): lane-dense partial sum of this chunk.
    acc_ref[...] += jnp.sum(mem_ref[...], axis=0, keepdims=True)

    @pl.when(s == pl.num_programs(1) - 1)
    def _():
        ctx_ref[0] = acc_ref[...]


# ---------------------------------------------------------------------------
# Kernel 2: classifier MLP on the reduced (TB, H) context (tiny vs. kernel 1).
# ---------------------------------------------------------------------------
def _classifier_kernel(num_layers, ctx_ref, w_cls_ref, b_cls_ref,
                       w_fin_ref, b_fin_ref, out_ref):
    h = ctx_ref[...]                                            # (TB, H)
    for i in range(num_layers):                                 # unrolled
        h = jnp.maximum(
            jnp.dot(h, w_cls_ref[i], preferred_element_type=jnp.float32)
            + b_cls_ref[i],
            0.0)
    # Final Linear(H, 1): contract H on both sides -> lane-dense (1, TB) row.
    logits = lax.dot_general(w_fin_ref[...], h, (((1,), (1,)), ((), ())),
                             preferred_element_type=jnp.float32)
    out_ref[0] = logits + b_fin_ref[0, 0]


def language_detector(memory_bank, w_att, b_att, w_ctx,
                      w_cls, b_cls, w_fin, b_fin,
                      *, batch_tile=None, seq_chunk=None):
    """Forward pass of LanguageDetector.

    memory_bank: (S, B, E) float32 (native seq-major ONMT layout).
    w_cls: (L, H, H) PyTorch Linear weights (out, in);  b_cls: (L, H).
    w_fin: (1, H);  b_fin: (1,).
    Returns (B, 1, 1) float32.

    w_att / b_att are accepted for API fidelity but cannot affect the output:
    F.softmax over the size-1 context-score axis is identically 1, so the
    attention-weighted context equals the sequence sum (allclose-equal to the
    faithful path; f32 summation order may differ).
    """
    S, B, E = memory_bank.shape
    L = int(w_cls.shape[0])
    if L == 0:
        # Classifier is just the final Linear; pass dummy (unused) weights.
        H = int(w_fin.shape[1])
        w_cls = jnp.zeros((1, H, H), jnp.float32)
        b_cls = jnp.zeros((1, H), jnp.float32)
    else:
        assert w_cls.ndim == 3 and w_cls.shape[1] == w_cls.shape[2]
        H = int(w_cls.shape[1])
    assert E == H, "classifier input width must equal enc_rnn_size"
    assert w_fin.shape == (1, H)
    # Attention elision is only valid for a single context output.
    assert w_ctx.shape[0] == 1, "sentence_context_vector must have one output"
    del w_att, b_att, w_ctx  # mathematically dead in this forward pass

    f32 = jnp.float32
    isz = 4

    # ---- tile selection ---------------------------------------------------
    # Folding the batch tile into the lane dim requires TB*E % 128 == 0.
    granule_b = math.lcm(8, 128 // math.gcd(E, 128))

    if seq_chunk is None:
        seq_chunk = 128
    if S <= seq_chunk:
        s_chunk, S_pad = S, S                   # full-extent block: always legal
    else:
        s_chunk = max(8, _round_down(seq_chunk, 8))
        S_pad = _round_up(S, s_chunk)

    if batch_tile is None:
        # ~8 MiB per memory-bank buffer (double-buffered by the pipeline).
        slab_budget = 8 * 1024 * 1024
        batch_tile = max(granule_b, slab_budget // max(1, s_chunk * E * isz))
    batch_tile = min(int(batch_tile), 512)

    TB = max(granule_b,
             _round_down(min(batch_tile, _round_up(B, granule_b)), granule_b))
    B_pad = _round_up(B, TB)
    # Keep >=2 "parallel" grid steps when possible (v7x has 2 TensorCores).
    while B_pad // TB < 2 and TB > granule_b:
        TB = max(granule_b, _round_down(TB // 2, granule_b))
        B_pad = _round_up(B, TB)

    n_bt = B_pad // TB
    n_sc = S_pad // s_chunk

    # ---- pad + lane-dense view (reshape is free: row-major contiguous) -----
    mb = memory_bank.astype(f32)
    if S_pad != S or B_pad != B:
        # Zero timesteps add 0 to the seq-sum; padded batch rows are sliced off.
        mb = jnp.pad(mb, ((0, S_pad - S), (0, B_pad - B), (0, 0)))
    mem2d = mb.reshape(S_pad, B_pad * E)

    def _vmem_limit(nbytes):
        # Explicit scoped-VMEM budget; cap at 48 MiB so the same tiling also
        # fits v7x's 64 MiB physical VMEM (v5e/v6e have 128 MiB).
        return int(min(max(2 * nbytes, 8 << 20), 48 << 20))

    # ---- kernel 1: sequence sum --------------------------------------------
    slab = s_chunk * TB * E * isz
    vmem1 = _vmem_limit(2 * slab + 3 * (8 * TB * E * isz))

    ctx3 = pl.pallas_call(
        _seq_sum_kernel,
        out_shape=jax.ShapeDtypeStruct((n_bt, 1, TB * E), f32),
        grid=(n_bt, n_sc),
        in_specs=[
            pl.BlockSpec((s_chunk, TB * E), lambda i, s: (s, i)),
        ],
        out_specs=pl.BlockSpec((1, 1, TB * E), lambda i, s: (i, 0, 0)),
        scratch_shapes=[pltpu.VMEM((1, TB * E), f32)],
        compiler_params=pltpu.CompilerParams(
            dimension_semantics=("parallel", "arbitrary"),
            vmem_limit_bytes=vmem1),
    )(mem2d)

    # (n_bt, 1, TB*E) -> (B_pad, E): free row-major reshape; ctx[b] is the
    # sequence-sum context of batch row b.
    ctx = ctx3.reshape(B_pad, E)

    # ---- kernel 2: classifier MLP -------------------------------------------
    Lk = max(L, 1)
    w_cls_t = jnp.swapaxes(w_cls.astype(f32), 1, 2)     # (L, H_in, H_out), MXU-native
    b_cls_r = b_cls.astype(f32).reshape(Lk, 1, H)
    w_fin_r = w_fin.astype(f32).reshape(1, H)
    b_fin_r = b_fin.astype(f32).reshape(1, 1)

    w_bytes = (Lk * H * H + Lk * H + H) * isz
    vmem2 = _vmem_limit(2 * (TB * H * isz) + 2 * w_bytes + 2 * (8 * TB * isz))

    out3 = pl.pallas_call(
        functools.partial(_classifier_kernel, L),
        out_shape=jax.ShapeDtypeStruct((n_bt, 1, TB), f32),
        grid=(n_bt,),
        in_specs=[
            pl.BlockSpec((TB, H), lambda i: (i, 0)),            # context rows
            pl.BlockSpec((Lk, H, H), lambda i: (0, 0, 0)),      # stacked cls W^T
            pl.BlockSpec((Lk, 1, H), lambda i: (0, 0, 0)),      # stacked cls b
            pl.BlockSpec((1, H), lambda i: (0, 0)),             # final W
            pl.BlockSpec(memory_space=pltpu.MemorySpace.SMEM),  # final b (scalar)
        ],
        out_specs=pl.BlockSpec((1, 1, TB), lambda i: (i, 0, 0)),
        compiler_params=pltpu.CompilerParams(
            dimension_semantics=("parallel",),
            vmem_limit_bytes=vmem2),
    )(ctx, w_cls_t, b_cls_r, w_fin_r, b_fin_r)

    # Shape glue only: (n_bt, 1, TB) -> (B, 1, 1), dropping batch padding.
    return out3.reshape(B_pad)[:B].reshape(B, 1, 1)


if __name__ == "__main__":
    # Small shapes, deliberately NOT multiples of the tiles so the padding and
    # multi-chunk accumulation paths are exercised.
    S, B = 40, 24               # seq, batch
    E = 32                      # enc_rnn_size (== hidden_size for the classifier)
    A = 16                      # att_context_size
    H = 32                      # hidden_size
    L = 2                       # num_layers (dropout identity, batch_norm=False)

    key = jax.random.PRNGKey(0)
    ks = jax.random.split(key, 8)
    memory_bank = jax.random.normal(ks[0], (S, B, E), jnp.float32)

    # PyTorch Linear convention: W = (out, in).
    w_att = 0.1 * jax.random.normal(ks[1], (A, E), jnp.float32)
    b_att = 0.1 * jax.random.normal(ks[2], (A,), jnp.float32)
    w_ctx = 0.1 * jax.random.normal(ks[3], (1, A), jnp.float32)     # no bias
    w_cls = 0.1 * jax.random.normal(ks[4], (L, H, H), jnp.float32)
    b_cls = 0.1 * jax.random.normal(ks[5], (L, H), jnp.float32)
    w_fin = 0.1 * jax.random.normal(ks[6], (1, H), jnp.float32)
    b_fin = 0.1 * jax.random.normal(ks[7], (1,), jnp.float32)

    # Small explicit tiles here only to exercise padding / multi-chunk paths at
    # demo shapes; production shapes use the budget-driven defaults.
    out = language_detector(memory_bank, w_att, b_att, w_ctx,
                            w_cls, b_cls, w_fin, b_fin,
                            batch_tile=16, seq_chunk=16)
    out = jax.block_until_ready(out)

    # Pure-JAX reference of the exact PyTorch forward (attention path included,
    # even though softmax over a size-1 axis makes it a no-op).
    x = jnp.transpose(memory_bank, (1, 0, 2))                       # (B, S, E)
    att = jnp.tanh(jnp.einsum('bse,ae->bsa', x, w_att) + b_att)     # (B, S, A)
    score = jnp.einsum('bsa,ka->bsk', att, w_ctx)                   # (B, S, 1)
    align = jax.nn.softmax(score, axis=-1)                          # == 1.0
    c = jnp.einsum('bks,bse->bke', jnp.transpose(align, (0, 2, 1)), x)
    h = c
    for i in range(L):
        h = jnp.maximum(jnp.einsum('bke,fe->bkf', h, w_cls[i]) + b_cls[i], 0.0)
    ref = jnp.einsum('bkh,fh->bkf', h, w_fin) + b_fin               # (B, 1, 1)

    assert out.shape == (B, 1, 1), out.shape
    assert jnp.allclose(out, ref, atol=1e-4, rtol=1e-4), (out, ref)
    print("KERNEL_OK")
</pallas_src>

<mosaic_0001>
module attributes {stable_mosaic.version = 11 : i64} {
  func.func @_seq_sum_kernel(%arg0: i32, %arg1: i32, %arg2: memref<16x512xf32, #tpu.memory_space<vmem>>, %arg3: memref<1x1x512xf32, #tpu.memory_space<vmem>>, %arg4: memref<1x512xf32, #tpu.memory_space<vmem>>) attributes {dimension_semantics = [#tpu.dimension_semantics<parallel>, #tpu.dimension_semantics<arbitrary>], iteration_bounds = array<i64: 2, 3>, scalar_prefetch = 0 : i64, scratch_operands = 1 : i64, tpu.core_type = #tpu.core_type<tc>, window_params = [{transform_indices = @transform_0, window_bounds = array<i64: 16, 512>}, {transform_indices = @transform_1, window_bounds = array<i64: 1, 1, 512>}]} {
    %c0_i32 = arith.constant 0 : i32
    %0 = arith.cmpi eq, %arg1, %c0_i32 : i32
    %1 = arith.extui %0 : i1 to i32
    %c0_i32_0 = arith.constant 0 : i32
    %2 = arith.cmpi ne, %1, %c0_i32_0 : i32
    scf.if %2 {
      %cst_7 = arith.constant 0.000000e+00 : f32
      %12 = vector.broadcast %cst_7 : f32 to vector<1x512xf32>
      %c0_8 = arith.constant 0 : index
      %c0_9 = arith.constant 0 : index
      %13 = vector.load %arg4[%c0_8, %c0_9] : memref<1x512xf32, #tpu.memory_space<vmem>>, vector<1x512xf32>
      tpu.vector_store %arg4[%c0_8, %c0_9], %12 {strides = array<i32>} : memref<1x512xf32, #tpu.memory_space<vmem>>, vector<1x512xf32>,
    } else {
    }
    %c0 = arith.constant 0 : index
    %c0_1 = arith.constant 0 : index
    %3 = vector.load %arg4[%c0, %c0_1] : memref<1x512xf32, #tpu.memory_space<vmem>>, vector<1x512xf32>
    %c0_2 = arith.constant 0 : index
    %c0_3 = arith.constant 0 : index
    %4 = vector.load %arg2[%c0_2, %c0_3] : memref<16x512xf32, #tpu.memory_space<vmem>>, vector<16x512xf32>
    %cst = arith.constant dense<0.000000e+00> : vector<512xf32>
    %5 = vector.multi_reduction <add>, %4, %cst [0] : vector<16x512xf32> to vector<512xf32>
    %6 = vector.shape_cast %5 : vector<512xf32> to vector<1x512xf32>
    %7 = arith.addf %3, %6 : vector<1x512xf32>
    %c0_4 = arith.constant 0 : index
    %c0_5 = arith.constant 0 : index
    %8 = vector.load %arg4[%c0_4, %c0_5] : memref<1x512xf32, #tpu.memory_space<vmem>>, vector<1x512xf32>
    tpu.vector_store %arg4[%c0_4, %c0_5], %7 {strides = array<i32>} : memref<1x512xf32, #tpu.memory_space<vmem>>, vector<1x512xf32>,
    %c2_i32 = arith.constant 2 : i32
    %9 = arith.cmpi eq, %arg1, %c2_i32 : i32
    %10 = arith.extui %9 : i1 to i32
    %c0_i32_6 = arith.constant 0 : i32
    %11 = arith.cmpi ne, %10, %c0_i32_6 : i32
    scf.if %11 {
      %c0_7 = arith.constant 0 : index
      %c0_8 = arith.constant 0 : index
      %12 = vector.load %arg4[%c0_7, %c0_8] : memref<1x512xf32, #tpu.memory_space<vmem>>, vector<1x512xf32>
      %c0_9 = arith.constant 0 : index
      %c0_10 = arith.constant 0 : index
      %c0_11 = arith.constant 0 : index
      %13 = vector.load %arg3[%c0_9, %c0_10, %c0_11] : memref<1x1x512xf32, #tpu.memory_space<vmem>>, vector<1x1x512xf32>
      %14 = vector.shape_cast %13 : vector<1x1x512xf32> to vector<1x512xf32>
      %15 = vector.shape_cast %12 : vector<1x512xf32> to vector<1x1x512xf32>
      tpu.vector_store %arg3[%c0_9, %c0_10, %c0_11], %15 {strides = array<i32>} : memref<1x1x512xf32, #tpu.memory_space<vmem>>, vector<1x1x512xf32>,
    } else {
    }
    return
  }
  func.func @transform_0(%arg0: i32, %arg1: i32) -> (i32, i32) {
    %c0_i32 = arith.constant 0 : i32
    return %arg1, %arg0 : i32, i32
  }
  func.func @transform_1(%arg0: i32, %arg1: i32) -> (i32, i32, i32) {
    %c0_i32 = arith.constant 0 : i32
    %c0_i32_0 = arith.constant 0 : i32
    %c0_i32_1 = arith.constant 0 : i32
    return %arg0, %c0_i32, %c0_i32_0 : i32, i32, i32
  }
}

</mosaic_0001>

<llo_original>
// kernel: tpu_custom_call.1
$region0: #{tpu_custom_call.1}
  #allocation0 [shape = 'u32[]', space=smem, size = 0x4, offset = 0x4, fixed_abs, tag = 'smem constant byte address 0x4 - core index']
  #allocation1 [shape = 'u32[144,128]{1,0:T(1,128)}', space=vmem, size = 0x12000, scoped, tag = 'internal scratch']
  #allocation2 [shape = 'f32[1,512]{1,0:T(1,128)}', space=vmem, size = 0x800, scoped, tag = 'scratch operand']
  %s0 = inlined_call_operand.hbm [shape: f32[48,1024], index: 0, kind: input, shape index: {}]
  %s1 = inlined_call_operand.hbm [shape: f32[2,1,512], index: 1, kind: output, shape index: {}]
  %s2 = sld [smem:[#allocation0]]
  $region49: #{tpu_custom_call.1} parent=0
    _
  %s4 = ssub.s32 1, %s2
  %s5 = scalar_select 0, %s4, %s2
  $region1: #{tpu_custom_call.1} parent=0
    #allocation3 [shape = 'u8[65536]{0}', space=vmem, size = 0x10000, scoped, tag = 'input window, operand 0']
    #allocation4 [shape = 's32[2]{0}', space=sflag, size = 0x8, scoped, tag = 'scoped memory for tpu_custom_call.1']
    #allocation5 [shape = 's32[2]{0}', space=sflag, size = 0x8, scoped, tag = 'scoped memory for tpu_custom_call.1']
    #allocation6 [shape = 'u8[4096]{0}', space=vmem, size = 0x1000, scoped, tag = 'output window, operand 0']
    %6 = vsyncpa [#allocation4], 0
    %s7 = scalar_lea.sflag [#allocation4], 1
    %8 = vsyncpa %s7, 0
    %9 = vsyncpa [#allocation5], 0
    %s10 = scalar_lea.sflag [#allocation5], 1
    %11 = vsyncpa %s10, 0
    loop: start=0, step=1, limit=8
    $region2: #{tpu_custom_call.1} parent=1 // loop_pre_header
      _
    $region3: #{tpu_custom_call.1} parent=1 // loop_header
      %s13 = sphi 0, %s17
      %p14 = scmp.ge.s32.totalorder %s13, 8
      %s20 = sphi 0, %s32
      %s21 = sphi 0, %s28
      %s22 = sphi 0, %s20
      %s23 = sphi 0, %s21
      %s24 = sphi 0, %s22
      %s25 = sphi 0, %s23
      %s37 = sphi 0, %s39
      %s40 = sphi 0, %s37
      %s41 = sphi 0, %s40
      %s57 = sphi 0, %s41
      %s63 = sphi 0, %s65
      %s66 = sphi 0, %s63
      %s67 = sphi 0, %s66
      %s83 = sphi 0, %s67
    $region4: #{tpu_custom_call.1} parent=1 // loop_header_branch
      %16 = sbr.rel (%p14) target = $region8
    $region5: #{tpu_custom_call.1} parent=1 // loop_body
      %s18 = ssub.s32 %s13, 1
      %s19 = ssub.s32 %s13, 2
      %s26 = sadd.s32 1, %s21
      %p27 = scmp.ge.s32.totalorder %s26, 3
      %s28 = scalar_select %p27, 0, %s26
      %s29 = sadd.s32 1, %s20
      %s30 = scalar_select %p27, %s29, %s20
      %p31 = scmp.ge.s32.totalorder %s30, 2
      %s32 = scalar_select %p31, 0, %s30
      %s33 = ssub.s32 %s21, %s28
      %s34 = ssub.s32 %s20, %s32
      %s35 = sor.u32 %s33, %s34
      %p36 = scmp.eq.s32.totalorder %s35, 0
      %s38 = sadd.s32 %s37, 1
      %s39 = scalar_select %p36, %s37, %s38
      %p42 = pneg %p36
      %p43 = scmp.eq.s32.totalorder %s13, 5
      %p44 = por %p42, %p43
      %p45 = scmp.ne.s32.totalorder %s37, %s40
      %p46 = scmp.eq.s32.totalorder %s13, 0
      %p47 = por %p45, %p46
      %p48 = scmp.ne.s32.totalorder %s37, %s40
      %p49 = scmp.eq.s32.totalorder %s18, 5
      %p50 = por %p48, %p49
      %p51 = scmp.ne.s32.totalorder %s40, %s41
      %p52 = scmp.eq.s32.totalorder %s18, 0
      %p53 = por %p51, %p52
      %p54 = scmp.ne.s32.totalorder %s40, %s41
      %p55 = scmp.eq.s32.totalorder %s19, 5
      %p56 = por %p54, %p55
      %p58 = scmp.ne.s32.totalorder %s41, %s57
      %p59 = scmp.eq.s32.totalorder %s19, 0
      %p60 = por %p58, %p59
      %s61 = ssub.s32 %s20, %s32
      %p62 = scmp.eq.s32.totalorder %s61, 0
      %s64 = sadd.s32 %s63, 1
      %s65 = scalar_select %p62, %s63, %s64
      %p68 = pneg %p62
      %p69 = scmp.eq.s32.totalorder %s13, 5
      %p70 = por %p68, %p69
      %p71 = scmp.ne.s32.totalorder %s63, %s66
      %p72 = scmp.eq.s32.totalorder %s13, 0
      %p73 = por %p71, %p72
      %p74 = scmp.ne.s32.totalorder %s63, %s66
      %p75 = scmp.eq.s32.totalorder %s18, 5
      %p76 = por %p74, %p75
      %p77 = scmp.ne.s32.totalorder %s66, %s67
      %p78 = scmp.eq.s32.totalorder %s18, 0
      %p79 = por %p77, %p78
      %p80 = scmp.ne.s32.totalorder %s66, %s67
      %p81 = scmp.eq.s32.totalorder %s19, 5
      %p82 = por %p80, %p81
      %p84 = scmp.ne.s32.totalorder %s67, %s83
      %p85 = scmp.eq.s32.totalorder %s19, 0
      %p86 = por %p84, %p85
      %p87 = scmp.le.s32.totalorder 1, %s13
      %p88 = scmp.lt.s32.totalorder %s13, 7
      %p89 = pnand %p87, %p88
      %p90 = pneg %p89
      // Predicated region
      $region9: #{tpu_custom_call.1} parent=5 // pred_check
        _
      $region10: #{tpu_custom_call.1} parent=5 // pred_check_branch
        %92 = sbr.rel (%p89) target = $region12
      $region11: #{tpu_custom_call.1} parent=5 // pred_region
        %s93 = ssub.s32 %s13, 1
      $region12: #{tpu_custom_call.1} parent=5 // pred_fallthru
        _
      %p94 = scmp.lt.s32.totalorder %s13, 6
      // Predicated region
      $region13: #{tpu_custom_call.1} parent=5 // pred_check
        %p95 = pneg %p94
      $region14: #{tpu_custom_call.1} parent=5 // pred_check_branch
        %97 = sbr.rel (%p95) target = $region16
      $region15: #{tpu_custom_call.1} parent=5 // pred_region
        // Predicated region
        $region17: #{tpu_custom_call.1} parent=15 // pred_check
          %p98 = pneg %p47
        $region18: #{tpu_custom_call.1} parent=15 // pred_check_branch
          %100 = sbr.rel (%p98) target = $region20
        $region19: #{tpu_custom_call.1} parent=15 // pred_region
          %s101 = sand.u32 %s37, 1
          %s102 = scalar_lea.sflag [#allocation4], %s101
          %s103 = sand.u32 %s37, 1
          %s104 = smul.addr %s103, 64
          %s105 = scalar_lea.vmem [#allocation3], %s104
          %s106 = smul.u32 2, %s21
          %s107 = smul.u32 4, %s20
          %s109 = ssub.s32 1024, 1024
          %110 = vsyncadd %s102, %s109
          %s111 = smul.addr %s106, 8
          %s112 = sadd.s32 %s107, %s111
          %s113 = smul.addr %s112, 128
          %s114 = scalar_lea.hbm %s0, %s113
          %s115 = sshll.u32 %s105, 4
          %s116 = int_to_ptr.vmem [resolvable:$true] %s115
          %121 = dma.hbm_to_vmem [thread:$0]  %s114, 1024, %s116, %s102, 1024, 512, 32
        $region20: #{tpu_custom_call.1} parent=15 // pred_fallthru
          _
      $region16: #{tpu_custom_call.1} parent=5 // pred_fallthru
        _
      %p122 = scmp.le.s32.totalorder 1, %s13
      %p123 = scmp.lt.s32.totalorder %s13, 7
      %p124 = pnand %p122, %p123
      %p125 = pneg %p124
      // Predicated region
      $region21: #{tpu_custom_call.1} parent=5 // pred_check
        _
      $region22: #{tpu_custom_call.1} parent=5 // pred_check_branch
        %127 = sbr.rel (%p124) target = $region24
      $region23: #{tpu_custom_call.1} parent=5 // pred_region
        %s128 = ssub.s32 %s13, 1
        %s129 = sand.u32 %s40, 1
        %s130 = scalar_lea.sflag [#allocation4], %s129
        %s131 = sand.u32 %s40, 1
        %s132 = smul.addr %s131, 64
        %s133 = scalar_lea.vmem [#allocation3], %s132
        // Predicated region
        $region25: #{tpu_custom_call.1} parent=23 // pred_check
          %p134 = pneg %p53
        $region26: #{tpu_custom_call.1} parent=23 // pred_check_branch
          %136 = sbr.rel (%p134) target = $region28
        $region27: #{tpu_custom_call.1} parent=23 // pred_region
          %137 = dma.done %s130, 1024
        $region28: #{tpu_custom_call.1} parent=23 // pred_fallthru
          _
        %s138 = sand.u32 %s40, 1
        %s139 = scalar_lea.sflag [#allocation4], %s138
        %s140 = sand.u32 %s40, 1
        %s141 = smul.addr %s140, 64
        %s142 = scalar_lea.vmem [#allocation3], %s141
        %p143 = pneg %p53
        %p144 = pneg %p50
        %p145 = pneg %p79
        %p146 = pneg %p76
        %s147 = sand.u32 %s66, 1
        %s148 = scalar_lea.sflag [#allocation5], %s147
        %s149 = sand.u32 %s66, 1
        %s150 = smul.addr %s149, 4
        %s151 = scalar_lea.vmem [#allocation6], %s150
        %s152 = smul.u32 2, %s23
        %s153 = smul.u32 4, %s22
        %p154 = scmp.eq.s32.totalorder %s23, 0
        // Predicated region
        $region29: #{tpu_custom_call.1} parent=23 // pred_check
          %p155 = pneg %p154
        $region30: #{tpu_custom_call.1} parent=23 // pred_check_branch
          %157 = sbr.rel (%p155) target = $region32
        $region31: #{tpu_custom_call.1} parent=23 // pred_region
          %v158 = vlaneseq
          %vm159 = vcmp.ge.s32.totalorder %v158, 0
          %vm160 = vcmp.lt.s32.totalorder %v158, 512
          %vm161 = vmand %vm159, %vm160
          %162 = vst.msk [vmem:[#allocation2] sm:$0xf] %vm161, 0.0
        $region32: #{tpu_custom_call.1} parent=23 // pred_fallthru
          _
        %v163 = vld [vmem:[#allocation2] sm:$0xf]
        %v164 = vld [vmem:[%s133] sm:$0xff]
        %v165 = vld [vmem:[%s133 + $0x8] sm:$0xff]
        %v166 = vld [vmem:[%s133 + $0x10] sm:$0xff]
        %v167 = vld [vmem:[%s133 + $0x18] sm:$0xff]
        %v168 = vld [vmem:[%s133 + $0x20] sm:$0xff]
        %v169 = vld [vmem:[%s133 + $0x28] sm:$0xff]
        %v170 = vld [vmem:[%s133 + $0x30] sm:$0xff]
        %v171 = vld [vmem:[%s133 + $0x38] sm:$0xff]
        %v172 = vadd.f32 %v164, %v168
        %v173 = vrot.slane %v172, 4
        %v174 = vadd.f32 %v172, %v173
        %v175 = vrot.slane %v174, 2
        %v176 = vadd.f32 %v174, %v175
        %v177 = vrot.slane %v176, 1
        %v178 = vadd.f32 %v176, %v177
        %v179 = vadd.f32 %v165, %v169
        %v180 = vrot.slane %v179, 4
        %v181 = vadd.f32 %v179, %v180
        %v182 = vrot.slane %v181, 2
        %v183 = vadd.f32 %v181, %v182
        %v184 = vrot.slane %v183, 1
        %v185 = vadd.f32 %v183, %v184
        %v186 = vadd.f32 %v166, %v170
        %v187 = vrot.slane %v186, 4
        %v188 = vadd.f32 %v186, %v187
        %v189 = vrot.slane %v188, 2
        %v190 = vadd.f32 %v188, %v189
        %v191 = vrot.slane %v190, 1
        %v192 = vadd.f32 %v190, %v191
        %v193 = vadd.f32 %v167, %v171
        %v194 = vrot.slane %v193, 4
        %v195 = vadd.f32 %v193, %v194
        %v196 = vrot.slane %v195, 2
        %v197 = vadd.f32 %v195, %v196
        %v198 = vrot.slane %v197, 1
        %v199 = vadd.f32 %v197, %v198
        %v204 = vcombine.low %v178, %v185
        %v205 = vcombine.low %v192, %v199
        %v207 = vunpack.c.l.s4 1966171168
        %v208 = vunpack.c.0.s8 %v207
        %v209 = vlaneseq
        %v210 = vshrl.u32 %v209, 7
        %v211 = vsub.s32 %v208, %v210
        %v212 = vrot.slane %v204, %v211
        %v214 = vunpack.c.l.s4 1966171168
        %v215 = vunpack.c.0.s8 %v214
        %v216 = vlaneseq
        %v217 = vshrl.u32 %v216, 7
        %v218 = vsub.s32 %v215, %v217
        %v219 = vrot.slane %v205, %v218
        %v220 = vcombine.low %v212, %v219
        %v222 = vunpack.c.l.s4 1966171168
        %v223 = vunpack.c.0.s8 %v222
        %v224 = vlaneseq
        %v225 = vshrl.u32 %v224, 7
        %v226 = vsub.s32 %v223, %v225
        %v227 = vrot.slane %v220, %v226
        %v229 = vadd.f32 %v163, %v227
        %v230 = vlaneseq
        %vm231 = vcmp.ge.s32.totalorder %v230, 0
        %vm232 = vcmp.lt.s32.totalorder %v230, 512
        %vm233 = vmand %vm231, %vm232
        %234 = vst.msk [vmem:[#allocation2] sm:$0xf] %vm233, %v229
        %p235 = scmp.eq.s32.totalorder %s23, 2
        // Predicated region
        $region33: #{tpu_custom_call.1} parent=23 // pred_check
          %p236 = pneg %p235
        $region34: #{tpu_custom_call.1} parent=23 // pred_check_branch
          %238 = sbr.rel (%p236) target = $region36
        $region35: #{tpu_custom_call.1} parent=23 // pred_region
          %v239 = vld [vmem:[#allocation2] sm:$0xf]
          %240 = vst.msk [vmem:[%s151] sm:$0xf] %vm233, %v239
        $region36: #{tpu_custom_call.1} parent=23 // pred_fallthru
          _
        %s241 = sand.u32 %s66, 1
        %s242 = scalar_lea.sflag [#allocation5], %s241
        %s243 = sand.u32 %s66, 1
        %s244 = smul.addr %s243, 4
        %s245 = scalar_lea.vmem [#allocation6], %s244
        // Predicated region
        $region37: #{tpu_custom_call.1} parent=23 // pred_check
          %p246 = pneg %p76
        $region38: #{tpu_custom_call.1} parent=23 // pred_check_branch
          %248 = sbr.rel (%p246) target = $region40
        $region39: #{tpu_custom_call.1} parent=23 // pred_region
          %s250 = ssub.s32 64, 64
          %251 = vsyncadd %s242, %s250
          %s252 = smul.addr %s22, 4
          %s253 = smul.addr %s252, 16
          %s254 = scalar_lea.hbm %s1, %s253
          %s256 = sshll.u32 %s245, 4
          %s257 = int_to_ptr.vmem [resolvable:$true] %s256
          %259 = dma.vmem_to_hbm [thread:$0]  %s257, 64, %s254, %s242
        $region40: #{tpu_custom_call.1} parent=23 // pred_fallthru
          _
      $region24: #{tpu_custom_call.1} parent=5 // pred_fallthru
        _
      %p260 = scmp.le.s32.totalorder 2, %s13
      // Predicated region
      $region41: #{tpu_custom_call.1} parent=5 // pred_check
        %p261 = pneg %p260
      $region42: #{tpu_custom_call.1} parent=5 // pred_check_branch
        %263 = sbr.rel (%p261) target = $region44
      $region43: #{tpu_custom_call.1} parent=5 // pred_region
        %s264 = ssub.s32 %s13, 2
        // Predicated region
        $region45: #{tpu_custom_call.1} parent=43 // pred_check
          %p265 = pneg %p82
        $region46: #{tpu_custom_call.1} parent=43 // pred_check_branch
          %267 = sbr.rel (%p265) target = $region48
        $region47: #{tpu_custom_call.1} parent=43 // pred_region
          %s268 = sand.u32 %s67, 1
          %s269 = scalar_lea.sflag [#allocation5], %s268
          %s270 = sand.u32 %s67, 1
          %s271 = smul.addr %s270, 4
          %s272 = scalar_lea.vmem [#allocation6], %s271
          %273 = dma.done %s269, 64
        $region48: #{tpu_custom_call.1} parent=43 // pred_fallthru
          _
      $region44: #{tpu_custom_call.1} parent=5 // pred_fallthru
        _
    $region6: #{tpu_custom_call.1} parent=1 // loop_footer
      %s17 = sadd.s32 1, %s13
    $region7: #{tpu_custom_call.1} parent=1 // loop_footer_branch
      %12 = sbr.rel target = $region3
    $region8: #{tpu_custom_call.1} parent=1 // loop_exit
      _
    %274 = vsyncpa [#allocation4], 1
    %s275 = scalar_lea.sflag [#allocation4], 1
    %276 = vsyncpa %s275, 1
    %277 = vsyncpa [#allocation5], 1
    %s278 = scalar_lea.sflag [#allocation5], 1
    %279 = vsyncpa %s278, 1

</llo_original>
